<compile_context>
chip_gen: v7x
topology: tpu7x:2x2x1
jax: 0.10.0
libtpu: 0.0.40
codegen_flags: <defaults>
</compile_context>

<pallas_src>
import jax
import jax.numpy as jnp
from jax.experimental import pallas as pl
from jax.experimental.pallas import tpu as pltpu

LANE = 128


def _round_up(v, m):
    return ((v + m - 1) // m) * m


def _fused_vgcn_kernel(a_ref, x_ref, w1_ref, b1_ref, drop_ref, w2_ref, b2_ref, o_ref):
    """Fully fused VariationalGCNEncoder forward (single invocation, no grid).

    out = A @ (dropout(relu(A @ (X @ W1) + b1)) @ [W_mu | W_ls]) + [b_mu | b_ls]
    MXU matmuls accumulate in f32; the elementwise epilogue stays in f32.
    """
    cdt = a_ref.dtype  # MXU operand dtype (bf16 or f32)

    # ---- layer 1: h = dropout(relu(A @ (X @ W1) + b1)) --------------------
    xw = jnp.dot(x_ref[...], w1_ref[...], preferred_element_type=jnp.float32)
    h = jnp.dot(a_ref[...], xw.astype(cdt), preferred_element_type=jnp.float32)
    h = jnp.maximum(h + b1_ref[...], 0.0) * drop_ref[...]        # f32 epilogue

    # ---- layers mu / logstd, fused along the lane axis ---------------------
    hw = jnp.dot(h.astype(cdt), w2_ref[...], preferred_element_type=jnp.float32)
    out = jnp.dot(a_ref[...], hw.astype(cdt), preferred_element_type=jnp.float32)
    o_ref[...] = (out + b2_ref[...]).astype(o_ref.dtype)


def gcn_norm_adj(edge_index, num_nodes):
    """Dense symmetrically-normalized adjacency with self loops (PyG gcn_norm).

    Duplicate edges are summed (scatter-add semantics); self loops are reset to 1,
    matching add_remaining_self_loops(fill_value=1).
    """
    src, dst = edge_index[0], edge_index[1]
    adj = jnp.zeros((num_nodes, num_nodes), jnp.float32)
    adj = adj.at[dst, src].add(1.0)                    # message: src -> dst
    idx = jnp.arange(num_nodes)
    adj = adj.at[idx, idx].set(1.0)                    # self loops (weight 1)
    deg = adj.sum(axis=1)
    dinv = jax.lax.rsqrt(jnp.maximum(deg, 1e-12))
    return dinv[:, None] * adj * dinv[None, :]


def variational_gcn_encoder(x, edge_index, params, num_nodes, *,
                            dropout_p=0.3, rng_key=None, training=True,
                            compute_dtype=jnp.bfloat16):
    n = num_nodes
    hidden = params["w1"].shape[1]
    c_out = params["w_mu"].shape[1]
    o2 = 2 * c_out
    h_pad = _round_up(hidden, LANE)
    o_pad = _round_up(o2, LANE)

    a_hat = gcn_norm_adj(edge_index, n).astype(compute_dtype)
    xc = x.astype(compute_dtype)

    # Zero-pad weights/biases to 128-lane-dense shapes; padded channels stay 0.
    w1 = jnp.pad(params["w1"], ((0, 0), (0, h_pad - hidden))).astype(compute_dtype)
    b1 = jnp.pad(params["b1"][None, :], ((0, 0), (0, h_pad - hidden)))  # f32
    w2 = jnp.concatenate([params["w_mu"], params["w_ls"]], axis=1)       # (hidden, 2*c_out)
    w2 = jnp.pad(w2, ((0, h_pad - hidden), (0, o_pad - o2))).astype(compute_dtype)
    b2 = jnp.pad(jnp.concatenate([params["b_mu"], params["b_ls"]])[None, :],
                 ((0, 0), (0, o_pad - o2)))                              # f32

    # Inverted-dropout scale (host-side PRNG; see TODO above).
    if training and dropout_p > 0.0:
        if rng_key is None:
            rng_key = jax.random.PRNGKey(0)
        keep = jax.random.bernoulli(rng_key, 1.0 - dropout_p, (n, h_pad))
        drop_scale = keep.astype(jnp.float32) * (1.0 / (1.0 - dropout_p))
    else:
        drop_scale = jnp.ones((n, h_pad), jnp.float32)

    vmem = pl.BlockSpec(memory_space=pltpu.MemorySpace.VMEM)
    out = pl.pallas_call(
        _fused_vgcn_kernel,
        out_shape=jax.ShapeDtypeStruct((n, o_pad), jnp.float32),
        in_specs=[vmem] * 7,
        out_specs=vmem,
    )(a_hat, xc, w1, b1, drop_scale, w2, b2)

    mu = out[:, :c_out]
    logstd = out[:, c_out:o2]
    return mu, logstd


def _reference_forward(x, edge_index, params, num_nodes):
    """Pure-JAX f32 reference (eval mode, no dropout)."""
    a = gcn_norm_adj(edge_index, num_nodes)
    h = jnp.maximum(a @ (x @ params["w1"]) + params["b1"], 0.0)
    mu = a @ (h @ params["w_mu"]) + params["b_mu"]
    ls = a @ (h @ params["w_ls"]) + params["b_ls"]
    return mu, ls


def _glorot(key, fan_in, fan_out):
    lim = (6.0 / (fan_in + fan_out)) ** 0.5
    return jax.random.uniform(key, (fan_in, fan_out), jnp.float32, -lim, lim)


if __name__ == "__main__":
    # Shapes consistent with the module: num_nodes=32, in_channels=16, out_channels=8.
    N, C_IN, C_OUT = 32, 16, 8
    HIDDEN = 2 * C_OUT

    key = jax.random.PRNGKey(0)
    k_emb, k_e1, k_e2, k1, k2, k3, k_drop = jax.random.split(key, 7)

    # nn.Embedding(num_nodes, in_channels): node features = embedding table rows.
    # (self.emb is defined but unused inside forward(); mirrored by deriving x here.)
    emb_weight = jax.random.normal(k_emb, (N, C_IN), jnp.float32)
    x = emb_weight[jnp.arange(N)]                      # (N, C_IN)

    # Random undirected edge_index (2, 2E).
    E = 64
    src = jax.random.randint(k_e1, (E,), 0, N)
    dst = jax.random.randint(k_e2, (E,), 0, N)
    edge_index = jnp.stack([jnp.concatenate([src, dst]),
                            jnp.concatenate([dst, src])]).astype(jnp.int32)

    params = {
        "w1": _glorot(k1, C_IN, HIDDEN),    "b1": jnp.zeros((HIDDEN,), jnp.float32),
        "w_mu": _glorot(k2, HIDDEN, C_OUT), "b_mu": jnp.zeros((C_OUT,), jnp.float32),
        "w_ls": _glorot(k3, HIDDEN, C_OUT), "b_ls": jnp.zeros((C_OUT,), jnp.float32),
    }

    # Correctness check: eval mode (deterministic), f32 compute, vs pure-JAX reference.
    mu_ref, ls_ref = _reference_forward(x, edge_index, params, N)
    mu_f32, ls_f32 = variational_gcn_encoder(
        x, edge_index, params, N, training=False, compute_dtype=jnp.float32)
    assert bool(jnp.allclose(mu_f32, mu_ref, atol=5e-2, rtol=5e-2))
    assert bool(jnp.allclose(ls_f32, ls_ref, atol=5e-2, rtol=5e-2))

    # Training-mode run (dropout active), bf16 MXU operands / f32 accumulation.
    mu, logstd = variational_gcn_encoder(
        x, edge_index, params, N, rng_key=k_drop, training=True,
        compute_dtype=jnp.bfloat16)
    jax.block_until_ready((mu, logstd))

    assert mu.shape == (N, C_OUT) and logstd.shape == (N, C_OUT)
    assert bool(jnp.all(jnp.isfinite(mu))) and bool(jnp.all(jnp.isfinite(logstd)))
    print("KERNEL_OK")
</pallas_src>

<mosaic_0001>
module attributes {stable_mosaic.version = 11 : i64} {
  func.func @_fused_vgcn_kernel(%arg0: memref<32x32xf32, #tpu.memory_space<vmem>>, %arg1: memref<32x16xf32, #tpu.memory_space<vmem>>, %arg2: memref<16x128xf32, #tpu.memory_space<vmem>>, %arg3: memref<1x128xf32, #tpu.memory_space<vmem>>, %arg4: memref<32x128xf32, #tpu.memory_space<vmem>>, %arg5: memref<128x128xf32, #tpu.memory_space<vmem>>, %arg6: memref<1x128xf32, #tpu.memory_space<vmem>>, %arg7: memref<32x128xf32, #tpu.memory_space<vmem>>) attributes {dimension_semantics = [], scalar_prefetch = 0 : i64, scratch_operands = 0 : i64, tpu.core_type = #tpu.core_type<tc>} {
    %c0 = arith.constant 0 : index
    %c0_0 = arith.constant 0 : index
    %0 = vector.load %arg1[%c0, %c0_0] : memref<32x16xf32, #tpu.memory_space<vmem>>, vector<32x16xf32>
    %c0_1 = arith.constant 0 : index
    %c0_2 = arith.constant 0 : index
    %1 = vector.load %arg2[%c0_1, %c0_2] : memref<16x128xf32, #tpu.memory_space<vmem>>, vector<16x128xf32>
    %cst = arith.constant dense<0.000000e+00> : vector<32x128xf32>
    %2 = tpu.matmul %0, %1, %cst {dimension_numbers = #tpu.dot_dimension_numbers<[1], [0], [0], [1], [0, 0, 1, 1], [], []>} : vector<32x16xf32>, vector<16x128xf32>, vector<32x128xf32> -> vector<32x128xf32>
    %c0_3 = arith.constant 0 : index
    %c0_4 = arith.constant 0 : index
    %3 = vector.load %arg0[%c0_3, %c0_4] : memref<32x32xf32, #tpu.memory_space<vmem>>, vector<32x32xf32>
    %cst_5 = arith.constant dense<0.000000e+00> : vector<32x128xf32>
    %4 = tpu.matmul %3, %2, %cst_5 {dimension_numbers = #tpu.dot_dimension_numbers<[1], [0], [0], [1], [0, 0, 1, 1], [], []>} : vector<32x32xf32>, vector<32x128xf32>, vector<32x128xf32> -> vector<32x128xf32>
    %c0_6 = arith.constant 0 : index
    %c0_7 = arith.constant 0 : index
    %5 = vector.load %arg3[%c0_6, %c0_7] : memref<1x128xf32, #tpu.memory_space<vmem>>, vector<1x128xf32>
    %6 = vector.broadcast %5 : vector<1x128xf32> to vector<32x128xf32>
    %7 = arith.addf %4, %6 : vector<32x128xf32>
    %cst_8 = arith.constant 0.000000e+00 : f32
    %8 = vector.broadcast %cst_8 : f32 to vector<32x128xf32>
    %9 = arith.maximumf %7, %8 : vector<32x128xf32>
    %c0_9 = arith.constant 0 : index
    %c0_10 = arith.constant 0 : index
    %10 = vector.load %arg4[%c0_9, %c0_10] : memref<32x128xf32, #tpu.memory_space<vmem>>, vector<32x128xf32>
    %11 = arith.mulf %9, %10 : vector<32x128xf32>
    %c0_11 = arith.constant 0 : index
    %c0_12 = arith.constant 0 : index
    %12 = vector.load %arg5[%c0_11, %c0_12] : memref<128x128xf32, #tpu.memory_space<vmem>>, vector<128x128xf32>
    %cst_13 = arith.constant dense<0.000000e+00> : vector<32x128xf32>
    %13 = tpu.matmul %11, %12, %cst_13 {dimension_numbers = #tpu.dot_dimension_numbers<[1], [0], [0], [1], [0, 0, 1, 1], [], []>} : vector<32x128xf32>, vector<128x128xf32>, vector<32x128xf32> -> vector<32x128xf32>
    %c0_14 = arith.constant 0 : index
    %c0_15 = arith.constant 0 : index
    %14 = vector.load %arg0[%c0_14, %c0_15] : memref<32x32xf32, #tpu.memory_space<vmem>>, vector<32x32xf32>
    %cst_16 = arith.constant dense<0.000000e+00> : vector<32x128xf32>
    %15 = tpu.matmul %14, %13, %cst_16 {dimension_numbers = #tpu.dot_dimension_numbers<[1], [0], [0], [1], [0, 0, 1, 1], [], []>} : vector<32x32xf32>, vector<32x128xf32>, vector<32x128xf32> -> vector<32x128xf32>
    %c0_17 = arith.constant 0 : index
    %c0_18 = arith.constant 0 : index
    %16 = vector.load %arg6[%c0_17, %c0_18] : memref<1x128xf32, #tpu.memory_space<vmem>>, vector<1x128xf32>
    %17 = vector.broadcast %16 : vector<1x128xf32> to vector<32x128xf32>
    %18 = arith.addf %15, %17 : vector<32x128xf32>
    %c0_19 = arith.constant 0 : index
    %c0_20 = arith.constant 0 : index
    %19 = vector.load %arg7[%c0_19, %c0_20] : memref<32x128xf32, #tpu.memory_space<vmem>>, vector<32x128xf32>
    tpu.vector_store %arg7[%c0_19, %c0_20], %18 {strides = array<i32>} : memref<32x128xf32, #tpu.memory_space<vmem>>, vector<32x128xf32>,
    return
  }
}

</mosaic_0001>

<llo_original>
// kernel: tpu_custom_call.1
$region0: #{tpu_custom_call.1}
  #allocation0 [shape = 'u32[]', space=smem, size = 0x4, offset = 0x4, fixed_abs, tag = 'smem constant byte address 0x4 - core index']
  #allocation1 [shape = 'u32[144,128]{1,0:T(1,128)}', space=vmem, size = 0x12000, scoped, tag = 'internal scratch']
  %s0 = inlined_call_operand.vmem [shape: f32[32,32], index: 0, kind: input, shape index: {}]
  %s1 = inlined_call_operand.vmem [shape: f32[32,16], index: 1, kind: input, shape index: {}]
  %s2 = inlined_call_operand.vmem [shape: f32[16,128], index: 2, kind: input, shape index: {}]
  %s3 = inlined_call_operand.vmem [shape: f32[1,128], index: 3, kind: input, shape index: {}]
  %s4 = inlined_call_operand.hbm [shape: f32[32,128], index: 4, kind: input, shape index: {}]
  %s5 = inlined_call_operand.hbm [shape: f32[128,128], index: 5, kind: input, shape index: {}]
  %s6 = inlined_call_operand.vmem [shape: f32[1,128], index: 6, kind: input, shape index: {}]
  %s7 = inlined_call_operand.hbm [shape: f32[32,128], index: 7, kind: output, shape index: {}]
  %s8 = sld [smem:[#allocation0]]
  $region46: #{tpu_custom_call.1} parent=0
    _
  %s10 = ssub.s32 1, %s8
  %s11 = scalar_select 0, %s10, %s8
  $region1: #{tpu_custom_call.1} parent=0
    #allocation2 [shape = 'u8[16384]{0}', space=vmem, size = 0x4000, scoped, tag = 'input window, operand 4, single buffered']
    #allocation3 [shape = 's32[1]{0}', space=sflag, size = 0x4, scoped, tag = 'scoped memory for tpu_custom_call.1']
    #allocation4 [shape = 's32[1]{0}', space=sflag, size = 0x4, scoped, tag = 'scoped memory for tpu_custom_call.1']
    #allocation5 [shape = 'u8[65536]{0}', space=vmem, size = 0x10000, scoped, tag = 'input window, operand 5, single buffered']
    #allocation6 [shape = 's32[1]{0}', space=sflag, size = 0x4, scoped, tag = 'scoped memory for tpu_custom_call.1']
    #allocation7 [shape = 'u8[16384]{0}', space=vmem, size = 0x4000, scoped, tag = 'output window, operand 0, single buffered']
    %12 = vsyncpa [#allocation3], 0
    %13 = vsyncpa [#allocation6], 0
    %14 = vsyncpa [#allocation4], 0
    // Predicated region
    $region2: #{tpu_custom_call.1} parent=1 // pred_check
      _
    $region3: #{tpu_custom_call.1} parent=1 // pred_check_branch
      %16 = sbr.rel (0) target = $region5
    $region4: #{tpu_custom_call.1} parent=1 // pred_region
      _
    $region5: #{tpu_custom_call.1} parent=1 // pred_fallthru
      _
    // Predicated region
    $region6: #{tpu_custom_call.1} parent=1 // pred_check
      _
    $region7: #{tpu_custom_call.1} parent=1 // pred_check_branch
      %18 = sbr.rel (0) target = $region9
    $region8: #{tpu_custom_call.1} parent=1 // pred_region
      _
    $region9: #{tpu_custom_call.1} parent=1 // pred_fallthru
      _
    // Predicated region
    $region10: #{tpu_custom_call.1} parent=1 // pred_check
      _
    $region11: #{tpu_custom_call.1} parent=1 // pred_check_branch
      %20 = sbr.rel (0) target = $region13
    $region12: #{tpu_custom_call.1} parent=1 // pred_region
      _
    $region13: #{tpu_custom_call.1} parent=1 // pred_fallthru
      _
    // Predicated region
    $region14: #{tpu_custom_call.1} parent=1 // pred_check
      _
    $region15: #{tpu_custom_call.1} parent=1 // pred_check_branch
      %22 = sbr.rel (0) target = $region17
    $region16: #{tpu_custom_call.1} parent=1 // pred_region
      _
    $region17: #{tpu_custom_call.1} parent=1 // pred_fallthru
      _
    // Predicated region
    $region18: #{tpu_custom_call.1} parent=1 // pred_check
      _
    $region19: #{tpu_custom_call.1} parent=1 // pred_check_branch
      %24 = sbr.rel (0) target = $region21
    $region20: #{tpu_custom_call.1} parent=1 // pred_region
      %s26 = ssub.s32 512, 512
      %27 = vsyncadd [#allocation3], %s26
      %s28 = sshll.u32 [#allocation2], 4
      %s29 = int_to_ptr.vmem [resolvable:$true] %s28
      %34 = dma.hbm_to_vmem [thread:$0]  %s4, 512, %s29, [#allocation3], 128, 128, 8
    $region21: #{tpu_custom_call.1} parent=1 // pred_fallthru
      _
    // Predicated region
    $region22: #{tpu_custom_call.1} parent=1 // pred_check
      _
    $region23: #{tpu_custom_call.1} parent=1 // pred_check_branch
      %36 = sbr.rel (0) target = $region25
    $region24: #{tpu_custom_call.1} parent=1 // pred_region
      %s38 = ssub.s32 2048, 2048
      %39 = vsyncadd [#allocation6], %s38
      %s40 = sshll.u32 [#allocation5], 4
      %s41 = int_to_ptr.vmem [resolvable:$true] %s40
      %46 = dma.hbm_to_vmem [thread:$0]  %s5, 2048, %s41, [#allocation6], 128, 128, 8
    $region25: #{tpu_custom_call.1} parent=1 // pred_fallthru
      _
    // Predicated region
    $region26: #{tpu_custom_call.1} parent=1 // pred_check
      _
    $region27: #{tpu_custom_call.1} parent=1 // pred_check_branch
      %48 = sbr.rel (0) target = $region29
    $region28: #{tpu_custom_call.1} parent=1 // pred_region
      _
    $region29: #{tpu_custom_call.1} parent=1 // pred_fallthru
      _
    // Predicated region
    $region30: #{tpu_custom_call.1} parent=1 // pred_check
      _
    $region31: #{tpu_custom_call.1} parent=1 // pred_check_branch
      %50 = sbr.rel (0) target = $region33
    $region32: #{tpu_custom_call.1} parent=1 // pred_region
      %51 = dma.done [#allocation3], 512
    $region33: #{tpu_custom_call.1} parent=1 // pred_fallthru
      _
    // Predicated region
    $region34: #{tpu_custom_call.1} parent=1 // pred_check
      _
    $region35: #{tpu_custom_call.1} parent=1 // pred_check_branch
      %53 = sbr.rel (0) target = $region37
    $region36: #{tpu_custom_call.1} parent=1 // pred_region
      %54 = dma.done [#allocation6], 2048
    $region37: #{tpu_custom_call.1} parent=1 // pred_fallthru
      _
    %v55 = vld [vmem:[%s1] sm:$0xff]
    %v56 = vld [vmem:[%s1 + $0x8] sm:$0xff]
    %v57 = vld [vmem:[%s1 + $0x10] sm:$0xff]
    %v58 = vld [vmem:[%s1 + $0x18] sm:$0xff]
    %v59 = vld [vmem:[%s2] sm:$0xff]
    %v60 = vld [vmem:[%s2 + $0x8] sm:$0xff]
    %vm61 = vcmask 130048
    %v63 = vsel %vm61, %v55, 0
    %v66 = vsel %vm61, %v56, 0
    %v69 = vsel %vm61, %v57, 0
    %v72 = vsel %vm61, %v58, 0
    %74 = vmatprep.subr.mxu0 0.0
    %75 = vmatpush1.msra.mxu0 %v59
    %76 = vmatprep.subr.mxu0 0.0
    %77 = vmatpush1.msra.mxu0 %v60
    %78 = vmatprep.subr.mxu0 0.0
    %79 = vmatpush1.msra.mxu0 0.0
    %80 = vmatprep.subr.mxu0 0.0
    %81 = vmatpush1.msra.mxu0 0.0
    %82 = vmatprep.subr.mxu0 0.0
    %83 = vmatpush1.msra.mxu0 0.0
    %84 = vmatprep.subr.mxu0 0.0
    %85 = vmatpush1.msra.mxu0 0.0
    %86 = vmatprep.subr.mxu0 0.0
    %87 = vmatpush1.msra.mxu0 0.0
    %88 = vmatprep.subr.mxu0 0.0
    %89 = vmatpush1.msra.mxu0 0.0
    %90 = vmatprep.subr.mxu0 0.0
    %91 = vmatpush1.msra.mxu0 0.0
    %92 = vmatprep.subr.mxu0 0.0
    %93 = vmatpush1.msra.mxu0 0.0
    %94 = vmatprep.subr.mxu0 0.0
    %95 = vmatpush1.msra.mxu0 0.0
    %96 = vmatprep.subr.mxu0 0.0
    %97 = vmatpush1.msra.mxu0 0.0
    %98 = vmatprep.subr.mxu0 0.0
    %99 = vmatpush1.msra.mxu0 0.0
    %100 = vmatprep.subr.mxu0 0.0
    %101 = vmatpush1.msra.mxu0 0.0
    %102 = vmatprep.subr.mxu0 0.0
    %103 = vmatpush1.msra.mxu0 0.0
    %104 = vmatprep.subr.mxu0 0.0
    %105 = vmatpush1.msra.mxu0 0.0
    %106 = vmatprep.subr.mxu0 0.0
    %107 = vmatpush1.msra.mxu0 0.0
    %108 = vmatprep.subr.mxu0 0.0
    %109 = vmatpush1.msra.mxu0 0.0
    %110 = vmatprep.subr.mxu0 0.0
    %111 = vmatpush1.msra.mxu0 0.0
    %112 = vmatprep.subr.mxu0 0.0
    %113 = vmatpush1.msra.mxu0 0.0
    %114 = vmatprep.subr.mxu0 0.0
    %115 = vmatpush1.msra.mxu0 0.0
    %116 = vmatprep.subr.mxu0 0.0
    %117 = vmatpush1.msra.mxu0 0.0
    %118 = vmatprep.subr.mxu0 0.0
    %119 = vmatpush1.msra.mxu0 0.0
    %120 = vmatprep.subr.mxu0 0.0
    %121 = vmatpush1.msra.mxu0 0.0
    %122 = vmatprep.subr.mxu0 0.0
    %123 = vmatpush1.msra.mxu0 0.0
    %124 = vmatprep.subr.mxu0 0.0
    %125 = vmatpush1.msra.mxu0 0.0
    %126 = vmatprep.subr.mxu0 0.0
    %127 = vmatpush1.msra.mxu0 0.0
    %128 = vmatprep.subr.mxu0 0.0
    %129 = vmatpush1.msra.mxu0 0.0
    %130 = vmatprep.subr.mxu0 0.0
    %131 = vmatpush1.msra.mxu0 0.0
    %132 = vmatprep.subr.mxu0 0.0
    %133 = vmatpush1.msra.mxu0 0.0
    %134 = vmatprep.subr.mxu0 0.0
    %135 = vmatpush1.msra.mxu0 0.0
    %136 = vmatprep.subr.mxu0 0.0
    %137 = vmatpush1.msra.mxu0 0.0
    %138 = vmatprep.mubr.f32.mxu0 0.0
    %139 = vmatmul.mubr.f32.gmra.mrb[0].mxu0 %v63
    %v140 = vpop.f32.mrb[0].mxu0
    %v141 = vadd.f32 0.0, %v140
    %v142 = vpop.f32.mrb[0].mxu0
    %143 = vmatprep.mubr.f32.mxu0 0.0
    %144 = vmatmul.mubr.f32.gmra.mrb[0].mxu0 %v66
    %v145 = vpop.f32.mrb[0].mxu0
    %v146 = vadd.f32 0.0, %v145
    %v147 = vpop.f32.mrb[0].mxu0
    %148 = vmatprep.mubr.f32.mxu0 0.0
    %149 = vmatmul.mubr.f32.gmra.mrb[0].mxu0 %v69
    %v150 = vpop.f32.mrb[0].mxu0
    %v151 = vadd.f32 0.0, %v150
    %v152 = vpop.f32.mrb[0].mxu0
    %153 = vmatprep.mubr.f32.mxu0 0.0
    %154 = vmatmul.mubr.f32.gmra.mrb[0].mxu0 %v72
    %v155 = vpop.f32.mrb[0].mxu0
    %v156 = vadd.f32 0.0, %v155
    %v157 = vpop.f32.mrb[0].mxu0
    %158 = vdwg.mxu0
    %v159 = vld [vmem:[%s0] sm:$0xff]
    %v160 = vld [vmem:[%s0 + $0x8] sm:$0xff]
    %v161 = vld [vmem:[%s0 + $0x10] sm:$0xff]
    %v162 = vld [vmem:[%s0 + $0x18] sm:$0xff]
    %v163 = vld [vmem:[%s3] sm:$0x1]
    %v165 = vlaneseq
    %v166 = vshrl.u32 %v165, 7
    %v167 = vsub.s32 0, %v166
    %v168 = vrot.slane %v163, %v167
    %vm170 = vcmask 261120
    %v172 = vsel %vm170, %v159, 0
    %v175 = vsel %vm170, %v160, 0
    %v178 = vsel %vm170, %v161, 0
    %v181 = vsel %vm170, %v162, 0
    %183 = vmatprep.subr.mxu0 0.0
    %184 = vmatpush1.msra.mxu0 %v141
    %185 = vmatprep.subr.mxu0 0.0
    %186 = vmatpush1.msra.mxu0 %v146
    %187 = vmatprep.subr.mxu0 0.0
    %188 = vmatpush1.msra.mxu0 %v151
    %189 = vmatprep.subr.mxu0 0.0
    %190 = vmatpush1.msra.mxu0 %v156
    %191 = vmatprep.subr.mxu0 0.0
    %192 = vmatpush1.msra.mxu0 0.0
    %193 = vmatprep.subr.mxu0 0.0
    %194 = vmatpush1.msra.mxu0 0.0
    %195 = vmatprep.subr.mxu0 0.0
    %196 = vmatpush1.msra.mxu0 0.0
    %197 = vmatprep.subr.mxu0 0.0
    %198 = vmatpush1.msra.mxu0 0.0
    %199 = vmatprep.subr.mxu0 0.0
    %200 = vmatpush1.msra.mxu0 0.0
    %201 = vmatprep.subr.mxu0 0.0
    %202 = vmatpush1.msra.mxu0 0.0
    %203 = vmatprep.subr.mxu0 0.0
    %204 = vmatpush1.msra.mxu0 0.0
    %205 = vmatprep.subr.mxu0 0.0
    %206 = vmatpush1.msra.mxu0 0.0
    %207 = vmatprep.subr.mxu0 0.0
    %208 = vmatpush1.msra.mxu0 0.0
    %209 = vmatprep.subr.mxu0 0.0
    %210 = vmatpush1.msra.mxu0 0.0
    %211 = vmatprep.subr.mxu0 0.0
    %212 = vmatpush1.msra.mxu0 0.0
    %213 = vmatprep.subr.mxu0 0.0
    %214 = vmatpush1.msra.mxu0 0.0
    %215 = vmatprep.subr.mxu0 0.0
    %216 = vmatpush1.msra.mxu0 0.0
    %217 = vmatprep.subr.mxu0 0.0
    %218 = vmatpush1.msra.mxu0 0.0
    %219 = vmatprep.subr.mxu0 0.0
    %220 = vmatpush1.msra.mxu0 0.0
    %221 = vmatprep.subr.mxu0 0.0
    %222 = vmatpush1.msra.mxu0 0.0
    %223 = vmatprep.subr.mxu0 0.0
    %224 = vmatpush1.msra.mxu0 0.0
    %225 = vmatprep.subr.mxu0 0.0
    %226 = vmatpush1.msra.mxu0 0.0
    %227 = vmatprep.subr.mxu0 0.0
    %228 = vmatpush1.msra.mxu0 0.0
    %229 = vmatprep.subr.mxu0 0.0
    %230 = vmatpush1.msra.mxu0 0.0
    %231 = vmatprep.subr.mxu0 0.0
    %232 = vmatpush1.msra.mxu0 0.0
    %233 = vmatprep.subr.mxu0 0.0
    %234 = vmatpush1.msra.mxu0 0.0
    %235 = vmatprep.subr.mxu0 0.0
    %236 = vmatpush1.msra.mxu0 0.0
    %237 = vmatprep.subr.mxu0 0.0
    %238 = vmatpush1.msra.mxu0 0.0
    %239 = vmatprep.subr.mxu0 0.0
    %240 = vmatpush1.msra.mxu0 0.0
    %241 = vmatprep.subr.mxu0 0.0
    %242 = vmatpush1.msra.mxu0 0.0
    %243 = vmatprep.subr.mxu0 0.0
    %244 = vmatpush1.msra.mxu0 0.0
    %245 = vmatprep.subr.mxu0 0.0
    %246 = vmatpush1.msra.mxu0 0.0
    %247 = vmatprep.mubr.f32.mxu0 0.0
    %248 = vmatmul.mubr.f32.gmra.mrb[0].mxu0 %v172
    %v249 = vpop.f32.mrb[0].mxu0
    %v250 = vadd.f32 %v168, %v249
    %v251 = vpop.f32.mrb[0].mxu0
    %252 = vmatprep.mubr.f32.mxu0 0.0
    %253 = vmatmul.mubr.f32.gmra.mrb[0].mxu0 %v175
    %v254 = vpop.f32.mrb[0].mxu0
    %v255 = vadd.f32 %v168, %v254
    %v256 = vpop.f32.mrb[0].mxu0
    %257 = vmatprep.mubr.f32.mxu0 0.0
    %258 = vmatmul.mubr.f32.gmra.mrb[0].mxu0 %v178
    %v259 = vpop.f32.mrb[0].mxu0
    %v260 = vadd.f32 %v168, %v259
    %v261 = vpop.f32.mrb[0].mxu0
    %262 = vmatprep.mubr.f32.mxu0 0.0
    %263 = vmatmul.mubr.f32.gmra.mrb[0].mxu0 %v181
    %v264 = vpop.f32.mrb[0].mxu0
    %v265 = vadd.f32 %v168, %v264
    %v266 = vpop.f32.mrb[0].mxu0
    %267 = vdwg.mxu0
    %v268 = vmax.f32 %v250, 0.0
    %v269 = vmax.f32 %v255, 0.0
    %v270 = vmax.f32 %v260, 0.0
    %v271 = vmax.f32 %v265, 0.0
    %v272 = vld [vmem:[#allocation2] sm:$0xff]
    %v273 = vld [vmem:[#allocation2 + $0x8] sm:$0xff]
    %v274 = vld [vmem:[#allocation2 + $0x10] sm:$0xff]
    %v275 = vld [vmem:[#allocation2 + $0x18] sm:$0xff]
    %v276 = vmul.f32 %v268, %v272
    %v277 = vmul.f32 %v269, %v273
    %v278 = vmul.f32 %v270, %v274
    %v279 = vmul.f32 %v271, %v275
    %v280 = vld [vmem:[#allocation5] sm:$0xff]
    %v281 = vld [vmem:[#allocation5 + $0x8] sm:$0xff]
    %v282 = vld [vmem:[#allocation5 + $0x10] sm:$0xff]
    %v283 = vld [vmem:[#allocation5 + $0x18] sm:$0xff]
    %v284 = vld [vmem:[#allocation5 + $0x20] sm:$0xff]
    %v285 = vld [vmem:[#allocation5 + $0x28] sm:$0xff]
    %v286 = vld [vmem:[#allocation5 + $0x30] sm:$0xff]
    %v287 = vld [vmem:[#allocation5 + $0x38] sm:$0xff]
    %v288 = vld [vmem:[#allocation5 + $0x40] sm:$0xff]
    %v289 = vld [vmem:[#allocation5 + $0x48] sm:$0xff]
    %v290 = vld [vmem:[#allocation5 + $0x50] sm:$0xff]
    %v291 = vld [vmem:[#allocation5 + $0x58] sm:$0xff]
    %v292 = vld [vmem:[#allocation5 + $0x60] sm:$0xff]
    %v293 = vld [vmem:[#allocation5 + $0x68] sm:$0xff]
    %v294 = vld [vmem:[#allocation5 + $0x70] sm:$0xff]
    %v295 = vld [vmem:[#allocation5 + $0x78] sm:$0xff]
    %296 = vmatprep.subr.mxu0 0.0
    %297 = vmatpush1.msra.mxu0 %v280
    %298 = vmatprep.subr.mxu0 0.0
    %299 = vmatpush1.msra.mxu0 %v281
    %300 = vmatprep.subr.mxu0 0.0
    %301 = vmatpush1.msra.mxu0 %v282
    %302 = vmatprep.subr.mxu0 0.0
    %303 = vmatpush1.msra.mxu0 %v283
    %304 = vmatprep.subr.mxu0 0.0
    %305 = vmatpush1.msra.mxu0 %v284
    %306 = vmatprep.subr.mxu0 0.0
    %307 = vmatpush1.msra.mxu0 %v285
    %308 = vmatprep.subr.mxu0 0.0
    %309 = vmatpush1.msra.mxu0 %v286
    %310 = vmatprep.subr.mxu0 0.0
    %311 = vmatpush1.msra.mxu0 %v287
    %312 = vmatprep.subr.mxu0 0.0
    %313 = vmatpush1.msra.mxu0 %v288
    %314 = vmatprep.subr.mxu0 0.0
    %315 = vmatpush1.msra.mxu0 %v289
    %316 = vmatprep.subr.mxu0 0.0
    %317 = vmatpush1.msra.mxu0 %v290
    %318 = vmatprep.subr.mxu0 0.0
    %319 = vmatpush1.msra.mxu0 %v291
    %320 = vmatprep.subr.mxu0 0.0
    %321 = vmatpush1.msra.mxu0 %v292
    %322 = vmatprep.subr.mxu0 0.0
    %323 = vmatpush1.msra.mxu0 %v293
    %324 = vmatprep.subr.mxu0 0.0
    %325 = vmatpush1.msra.mxu0 %v294
    %326 = vmatprep.subr.mxu0 0.0
    %327 = vmatpush1.msra.mxu0 %v295
    %328 = vmatprep.subr.mxu0 0.0
    %329 = vmatpush1.msra.mxu0 0.0
    %330 = vmatprep.subr.mxu0 0.0
    %331 = vmatpush1.msra.mxu0 0.0
    %332 = vmatprep.subr.mxu0 0.0
    %333 = vmatpush1.msra.mxu0 0.0
    %334 = vmatprep.subr.mxu0 0.0
    %335 = vmatpush1.msra.mxu0 0.0
    %336 = vmatprep.subr.mxu0 0.0
    %337 = vmatpush1.msra.mxu0 0.0
    %338 = vmatprep.subr.mxu0 0.0
    %339 = vmatpush1.msra.mxu0 0.0
    %340 = vmatprep.subr.mxu0 0.0
    %341 = vmatpush1.msra.mxu0 0.0
    %342 = vmatprep.subr.mxu0 0.0
    %343 = vmatpush1.msra.mxu0 0.0
    %344 = vmatprep.subr.mxu0 0.0
    %345 = vmatpush1.msra.mxu0 0.0
    %346 = vmatprep.subr.mxu0 0.0
    %347 = vmatpush1.msra.mxu0 0.0
    %348 = vmatprep.subr.mxu0 0.0
    %349 = vmatpush1.msra.mxu0 0.0
    %350 = vmatprep.subr.mxu0 0.0
    %351 = vmatpush1.msra.mxu0 0.0
    %352 = vmatprep.subr.mxu0 0.0
    %353 = vmatpush1.msra.mxu0 0.0
    %354 = vmatprep.subr.mxu0 0.0
    %355 = vmatpush1.msra.mxu0 0.0
    %356 = vmatprep.subr.mxu0 0.0
    %357 = vmatpush1.msra.mxu0 0.0
    %358 = vmatprep.subr.mxu0 0.0
    %359 = vmatpush1.msra.mxu0 0.0
    %360 = vmatprep.mubr.f32.mxu0 0.0
    %361 = vmatmul.mubr.f32.gmra.mrb[0].mxu0 %v276
    %v362 = vpop.f32.mrb[0].mxu0
    %v363 = vadd.f32 0.0, %v362
    %v364 = vpop.f32.mrb[0].mxu0
    %365 = vmatprep.mubr.f32.mxu0 0.0
    %366 = vmatmul.mubr.f32.gmra.mrb[0].mxu0 %v277
    %v367 = vpop.f32.mrb[0].mxu0
    %v368 = vadd.f32 0.0, %v367
    %v369 = vpop.f32.mrb[0].mxu0
    %370 = vmatprep.mubr.f32.mxu0 0.0
    %371 = vmatmul.mubr.f32.gmra.mrb[0].mxu0 %v278
    %v372 = vpop.f32.mrb[0].mxu0
    %v373 = vadd.f32 0.0, %v372
    %v374 = vpop.f32.mrb[0].mxu0
    %375 = vmatprep.mubr.f32.mxu0 0.0
    %376 = vmatmul.mubr.f32.gmra.mrb[0].mxu0 %v279
    %v377 = vpop.f32.mrb[0].mxu0
    %v378 = vadd.f32 0.0, %v377
    %v379 = vpop.f32.mrb[0].mxu0
    %380 = vdwg.mxu0
    %v381 = vld [vmem:[%s6] sm:$0x1]
    %v383 = vlaneseq
    %v384 = vshrl.u32 %v383, 7
    %v385 = vsub.s32 0, %v384
    %v386 = vrot.slane %v381, %v385
    %388 = vmatprep.subr.mxu0 0.0
    %389 = vmatpush1.msra.mxu0 %v363
    %390 = vmatprep.subr.mxu0 0.0
    %391 = vmatpush1.msra.mxu0 %v368
    %392 = vmatprep.subr.mxu0 0.0
    %393 = vmatpush1.msra.mxu0 %v373
    %394 = vmatprep.subr.mxu0 0.0
    %395 = vmatpush1.msra.mxu0 %v378
    %396 = vmatprep.subr.mxu0 0.0
    %397 = vmatpush1.msra.mxu0 0.0
    %398 = vmatprep.subr.mxu0 0.0
    %399 = vmatpush1.msra.mxu0 0.0
    %400 = vmatprep.subr.mxu0 0.0
    %401 = vmatpush1.msra.mxu0 0.0
    %402 = vmatprep.subr.mxu0 0.0
    %403 = vmatpush1.msra.mxu0 0.0
    %404 = vmatprep.subr.mxu0 0.0
    %405 = vmatpush1.msra.mxu0 0.0
    %406 = vmatprep.subr.mxu0 0.0
    %407 = vmatpush1.msra.mxu0 0.0
    %408 = vmatprep.subr.mxu0 0.0
    %409 = vmatpush1.msra.mxu0 0.0
    %410 = vmatprep.subr.mxu0 0.0
    %411 = vmatpush1.msra.mxu0 0.0
    %412 = vmatprep.subr.mxu0 0.0
    %413 = vmatpush1.msra.mxu0 0.0
    %414 = vmatprep.subr.mxu0 0.0
    %415 = vmatpush1.msra.mxu0 0.0
    %416 = vmatprep.subr.mxu0 0.0
    %417 = vmatpush1.msra.mxu0 0.0
    %418 = vmatprep.subr.mxu0 0.0
    %419 = vmatpush1.msra.mxu0 0.0
    %420 = vmatprep.subr.mxu0 0.0
    %421 = vmatpush1.msra.mxu0 0.0
    %422 = vmatprep.subr.mxu0 0.0
    %423 = vmatpush1.msra.mxu0 0.0
    %424 = vmatprep.subr.mxu0 0.0
    %425 = vmatpush1.msra.mxu0 0.0
    %426 = vmatprep.subr.mxu0 0.0
    %427 = vmatpush1.msra.mxu0 0.0
    %428 = vmatprep.subr.mxu0 0.0
    %429 = vmatpush1.msra.mxu0 0.0
    %430 = vmatprep.subr.mxu0 0.0
    %431 = vmatpush1.msra.mxu0 0.0
    %432 = vmatprep.subr.mxu0 0.0
    %433 = vmatpush1.msra.mxu0 0.0
    %434 = vmatprep.subr.mxu0 0.0
    %435 = vmatpush1.msra.mxu0 0.0
    %436 = vmatprep.subr.mxu0 0.0
    %437 = vmatpush1.msra.mxu0 0.0
    %438 = vmatprep.subr.mxu0 0.0
    %439 = vmatpush1.msra.mxu0 0.0
    %440 = vmatprep.subr.mxu0 0.0
    %441 = vmatpush1.msra.mxu0 0.0
    %442 = vmatprep.subr.mxu0 0.0
    %443 = vmatpush1.msra.mxu0 0.0
    %444 = vmatprep.subr.mxu0 0.0
    %445 = vmatpush1.msra.mxu0 0.0
    %446 = vmatprep.subr.mxu0 0.0
    %447 = vmatpush1.msra.mxu0 0.0
    %448 = vmatprep.subr.mxu0 0.0
    %449 = vmatpush1.msra.mxu0 0.0
    %450 = vmatprep.subr.mxu0 0.0
    %451 = vmatpush1.msra.mxu0 0.0
    %452 = vmatprep.mubr.f32.mxu0 0.0
    %453 = vmatmul.mubr.f32.gmra.mrb[0].mxu0 %v172
    %v454 = vpop.f32.mrb[0].mxu0
    %v455 = vadd.f32 %v386, %v454
    %v456 = vpop.f32.mrb[0].mxu0
    %457 = vmatprep.mubr.f32.mxu0 0.0
    %458 = vmatmul.mubr.f32.gmra.mrb[0].mxu0 %v175
    %v459 = vpop.f32.mrb[0].mxu0
    %v460 = vadd.f32 %v386, %v459
    %v461 = vpop.f32.mrb[0].mxu0
    %462 = vmatprep.mubr.f32.mxu0 0.0
    %463 = vmatmul.mubr.f32.gmra.mrb[0].mxu0 %v178
    %v464 = vpop.f32.mrb[0].mxu0
    %v465 = vadd.f32 %v386, %v464
    %v466 = vpop.f32.mrb[0].mxu0
    %467 = vmatprep.mubr.f32.mxu0 0.0
    %468 = vmatmul.mubr.f32.gmra.mrb[0].mxu0 %v181
    %v469 = vpop.f32.mrb[0].mxu0
    %v470 = vadd.f32 %v386, %v469
    %v471 = vpop.f32.mrb[0].mxu0
    %472 = vdwg.mxu0
    %473 = vst [vmem:[#allocation7] sm:$0xff] %v455
    %474 = vst [vmem:[#allocation7 + $0x8] sm:$0xff] %v460
    %475 = vst [vmem:[#allocation7 + $0x10] sm:$0xff] %v465
    %476 = vst [vmem:[#allocation7 + $0x18] sm:$0xff] %v470
    // Predicated region
    $region38: #{tpu_custom_call.1} parent=1 // pred_check
      _
    $region39: #{tpu_custom_call.1} parent=1 // pred_check_branch
      %478 = sbr.rel (0) target = $region41
    $region40: #{tpu_custom_call.1} parent=1 // pred_region
      %s480 = ssub.s32 512, 512
      %481 = vsyncadd [#allocation4], %s480
      %s482 = sshll.u32 [#allocation7], 4
      %s483 = int_to_ptr.vmem [resolvable:$true] %s482
      %488 = dma.vmem_to_hbm [thread:$0]  %s483, 512, %s7, [#allocation4], 128, 128, 8
    $region41: #{tpu_custom_call.1} parent=1 // pred_fallthru
      _
    // Predicated region
    $region42: #{tpu_custom_call.1} parent=1 // pred_check
      _
    $region43: #{tpu_custom_call.1} parent=1 // pred_check_branch
      %490 = sbr.rel (0) target = $region45
    $region44: #{tpu_custom_call.1} parent=1 // pred_region
      %491 = dma.done [#allocation4], 512
    $region45: #{tpu_custom_call.1} parent=1 // pred_fallthru
      _
    %492 = vsyncpa [#allocation3], 1
    %493 = vsyncpa [#allocation6], 1
    %494 = vsyncpa [#allocation4], 1

</llo_original>
